<compile_context>
chip_gen: v7x
topology: tpu7x:2x2x1
jax: 0.10.0
libtpu: 0.0.40
codegen_flags: <defaults>
</compile_context>

<pallas_src>
import jax
import jax.numpy as jnp
from jax.experimental import pallas as pl
from jax.experimental.pallas import tpu as pltpu


# ---------------------------------------------------------------------------
# Helpers
# ---------------------------------------------------------------------------
def _interp_matrix(n_out, n_in):
    """Dense (n_out, n_in) bilinear-interpolation matrix, align_corners=True.

    Weight of input index j for output index i is max(0, 1 - |src_i - j|),
    with src_i = i * (n_in - 1) / (n_out - 1)   (PyTorch align_corners=True).
    """
    scale = (n_in - 1) / (n_out - 1) if n_out > 1 else 0.0
    src = jnp.arange(n_out, dtype=jnp.float32) * jnp.float32(scale)
    idx = jnp.arange(n_in, dtype=jnp.float32)
    return jnp.maximum(1.0 - jnp.abs(src[:, None] - idx[None, :]), 0.0)


def _pick_tile(total, cap, align):
    """Largest tile <= cap that is either == total or an `align`-multiple
    dividing `total` (falls back to the whole dim if none exists)."""
    if total <= cap:
        return total
    t = (cap // align) * align
    while t >= align:
        if total % t == 0:
            return t
        t -= align
    return total


# ---------------------------------------------------------------------------
# Kernel 1: per-batch attention map (conv -> resize -> bias -> sigmoid)
# ---------------------------------------------------------------------------
def _attention_map_kernel(mask_ref, ry_ref, rx_ref, wc_ref, bias_ref, att_ref):
    m = mask_ref[0]                                       # (Cm, h, w)
    # 1x1 conv == weighted channel reduction; commuted before the linear resize.
    reduced = jnp.sum(m * wc_ref[...], axis=0)            # (h, w)
    # Separable bilinear resize as two small matmuls (no gathers, no transpose).
    tmp = jnp.dot(ry_ref[...], reduced,
                  preferred_element_type=jnp.float32)     # (H, w)
    logits = jax.lax.dot_general(
        tmp, rx_ref[...], (((1,), (1,)), ((), ())),
        preferred_element_type=jnp.float32)               # (H, W)
    logits = logits + bias_ref[0]                         # SMEM scalar bias
    att_ref[0] = 1.0 / (1.0 + jnp.exp(-logits))           # sigmoid (exp -> EUP)


# ---------------------------------------------------------------------------
# Kernel 2: lane-dense broadcast multiply  out = features * attention
# ---------------------------------------------------------------------------
def _apply_attention_kernel(feat_ref, att_ref, out_ref):
    f = feat_ref[...].astype(out_ref.dtype)               # (1, tc, tl)
    a = att_ref[...].astype(out_ref.dtype)                # (1, 1,  tl)
    out_ref[...] = f * a                                  # broadcast over channels


# ---------------------------------------------------------------------------
# Wrapper
# ---------------------------------------------------------------------------
def attention_module(features, mask, conv_weight, conv_bias,
                     *, channel_tile=None, lane_tile=None,
                     target_block_bytes=4 * 1024 * 1024):
    """features: (B, Cf, H, W); mask: (B, Cm, h, w);
       conv_weight: (1, Cm, 1, 1); conv_bias: (1,)."""
    mask = mask.astype(jnp.float32)                       # matches `.float()` in the spec
    B, Cf, H, W = features.shape
    Bm, Cm, h, w = mask.shape
    assert Bm == B

    out_dtype = jnp.promote_types(features.dtype, jnp.float32)

    wc = conv_weight.reshape(Cm, 1, 1).astype(jnp.float32)
    bias = conv_bias.reshape(1).astype(jnp.float32)
    ry = _interp_matrix(H, h)                             # (H, h)  hoisted out of the kernel
    rx = _interp_matrix(W, w)                             # (W, w)

    # ---- kernel 1: attention map, grid over batch -------------------------
    att = pl.pallas_call(
        _attention_map_kernel,
        out_shape=jax.ShapeDtypeStruct((B, H, W), jnp.float32),
        grid_spec=pltpu.PrefetchScalarGridSpec(
            num_scalar_prefetch=0,
            grid=(B,),
            in_specs=[
                pl.BlockSpec((1, Cm, h, w), lambda b: (b, 0, 0, 0)),
                pl.BlockSpec((H, h), lambda b: (0, 0)),
                pl.BlockSpec((W, w), lambda b: (0, 0)),
                pl.BlockSpec((Cm, 1, 1), lambda b: (0, 0, 0)),
                pl.BlockSpec(memory_space=pltpu.MemorySpace.SMEM),
            ],
            out_specs=pl.BlockSpec((1, H, W), lambda b: (b, 0, 0)),
        ),
        compiler_params=pltpu.CompilerParams(
            dimension_semantics=("parallel",),
        ),
    )(mask, ry, rx, wc, bias)

    # ---- kernel 2: lane-dense elementwise multiply -------------------------
    HW = H * W
    feat_flat = features.reshape(B, Cf, HW)               # wrapper-side layout plumbing
    att_flat = att.reshape(B, 1, HW)

    itemsize = max(features.dtype.itemsize, jnp.dtype(out_dtype).itemsize)
    if lane_tile is None:
        lane_tile = _pick_tile(HW, 32768, 128)            # lane-dense, multiple of 128
    if channel_tile is None:
        max_tc = max(1, target_block_bytes // (lane_tile * itemsize))
        channel_tile = _pick_tile(Cf, max_tc, 8)          # bounds VMEM on v7x (64 MiB)

    grid = (B, pl.cdiv(Cf, channel_tile), pl.cdiv(HW, lane_tile))

    out_flat = pl.pallas_call(
        _apply_attention_kernel,
        out_shape=jax.ShapeDtypeStruct((B, Cf, HW), out_dtype),
        grid_spec=pltpu.PrefetchScalarGridSpec(
            num_scalar_prefetch=0,
            grid=grid,
            in_specs=[
                pl.BlockSpec((1, channel_tile, lane_tile),
                             lambda b, c, l: (b, c, l)),
                pl.BlockSpec((1, 1, lane_tile),
                             lambda b, c, l: (b, 0, l)),
            ],
            out_specs=pl.BlockSpec((1, channel_tile, lane_tile),
                                   lambda b, c, l: (b, c, l)),
        ),
        compiler_params=pltpu.CompilerParams(
            dimension_semantics=("parallel", "parallel", "parallel"),
            vmem_limit_bytes=48 * 1024 * 1024,
        ),
    )(feat_flat, att_flat)

    return out_flat.reshape(B, Cf, H, W)


# ---------------------------------------------------------------------------
# Plain-JAX reference (independent: gather-based bilinear, conv AFTER resize)
# ---------------------------------------------------------------------------
def ref_attention_module(features, mask, conv_weight, conv_bias):
    features = features.astype(jnp.float32)
    mask = mask.astype(jnp.float32)
    B, Cf, H, W = features.shape
    _, Cm, h, w = mask.shape

    def coords(n_out, n_in):
        if n_out > 1:
            return jnp.arange(n_out, dtype=jnp.float32) * (n_in - 1) / (n_out - 1)
        return jnp.zeros((n_out,), jnp.float32)

    sy, sx = coords(H, h), coords(W, w)
    y0 = jnp.clip(jnp.floor(sy).astype(jnp.int32), 0, h - 1)
    y1 = jnp.clip(y0 + 1, 0, h - 1)
    x0 = jnp.clip(jnp.floor(sx).astype(jnp.int32), 0, w - 1)
    x1 = jnp.clip(x0 + 1, 0, w - 1)
    wy = (sy - y0.astype(jnp.float32))[:, None]           # (H, 1)
    wx = (sx - x0.astype(jnp.float32))[None, :]           # (1, W)

    rows0 = jnp.take(mask, y0, axis=2)                    # (B, Cm, H, w)
    rows1 = jnp.take(mask, y1, axis=2)
    v00 = jnp.take(rows0, x0, axis=3)                     # (B, Cm, H, W)
    v01 = jnp.take(rows0, x1, axis=3)
    v10 = jnp.take(rows1, x0, axis=3)
    v11 = jnp.take(rows1, x1, axis=3)
    mask_resized = (v00 * (1 - wy) * (1 - wx) + v01 * (1 - wy) * wx
                    + v10 * wy * (1 - wx) + v11 * wy * wx)

    wvec = conv_weight.reshape(Cm).astype(jnp.float32)
    logits = jnp.einsum("bchw,c->bhw", mask_resized, wvec) + conv_bias[0]
    att = jax.nn.sigmoid(logits)[:, None, :, :]           # (B, 1, H, W)
    return features * att


if __name__ == "__main__":
    key = jax.random.PRNGKey(0)

    def make_inputs(k, B, Cf, H, W, h, w):
        kf, km, kw, kb = jax.random.split(k, 4)
        features = jax.random.normal(kf, (B, Cf, H, W), jnp.float32)
        mask = jax.random.normal(km, (B, Cf, h, w), jnp.float32)
        conv_weight = 0.3 * jax.random.normal(kw, (1, Cf, 1, 1), jnp.float32)
        conv_bias = 0.1 * jax.random.normal(kb, (1,), jnp.float32)
        return features, mask, conv_weight, conv_bias

    configs = [
        dict(B=2, Cf=4, H=16, W=16, h=8, w=8),   # typical small shape
        dict(B=1, Cf=8, H=24, W=20, h=5, w=7),   # non-square, odd resize ratio
    ]
    keys = jax.random.split(key, len(configs) + 1)
    for cfg, k in zip(configs, keys[:-1]):
        fe, ma, cw, cb = make_inputs(k, **cfg)
        out = jax.block_until_ready(attention_module(fe, ma, cw, cb))
        ref = ref_attention_module(fe, ma, cw, cb)
        assert out.shape == fe.shape
        max_err = float(jnp.max(jnp.abs(out - ref)))
        assert jnp.allclose(out, ref, atol=1e-5, rtol=1e-4), (cfg, max_err)

    # Exercise the multi-tile (channel + lane tiled) path explicitly.
    fe, ma, cw, cb = make_inputs(keys[-1], B=1, Cf=16, H=32, W=32, h=16, w=16)
    out = jax.block_until_ready(
        attention_module(fe, ma, cw, cb, channel_tile=8, lane_tile=512))
    ref = ref_attention_module(fe, ma, cw, cb)
    max_err = float(jnp.max(jnp.abs(out - ref)))
    assert jnp.allclose(out, ref, atol=1e-5, rtol=1e-4), max_err

    print("KERNEL_OK")
</pallas_src>

<mosaic_0001>
module attributes {stable_mosaic.version = 11 : i64} {
  func.func @_attention_map_kernel(%arg0: i32, %arg1: memref<1x4x8x8xf32, #tpu.memory_space<vmem>>, %arg2: memref<16x8xf32, #tpu.memory_space<vmem>>, %arg3: memref<16x8xf32, #tpu.memory_space<vmem>>, %arg4: memref<4x1x1xf32, #tpu.memory_space<vmem>>, %arg5: memref<1xf32, #tpu.memory_space<smem>>, %arg6: memref<1x16x16xf32, #tpu.memory_space<vmem>>) attributes {dimension_semantics = [#tpu.dimension_semantics<parallel>], iteration_bounds = array<i64: 2>, scalar_prefetch = 0 : i64, scratch_operands = 0 : i64, tpu.core_type = #tpu.core_type<tc>, window_params = [{transform_indices = @transform_0, window_bounds = array<i64: 1, 4, 8, 8>}, {pipeline_mode = #tpu.pipeline_mode<synchronous>, transform_indices = @transform_1, window_bounds = array<i64: 16, 8>}, {pipeline_mode = #tpu.pipeline_mode<synchronous>, transform_indices = @transform_2, window_bounds = array<i64: 16, 8>}, {pipeline_mode = #tpu.pipeline_mode<synchronous>, transform_indices = @transform_3, window_bounds = array<i64: 4, 1, 1>}, {transform_indices = @transform_4, window_bounds = array<i64: 1>}, {transform_indices = @transform_5, window_bounds = array<i64: 1, 16, 16>}]} {
    %c0 = arith.constant 0 : index
    %c0_0 = arith.constant 0 : index
    %c0_1 = arith.constant 0 : index
    %c0_2 = arith.constant 0 : index
    %0 = vector.load %arg1[%c0, %c0_0, %c0_1, %c0_2] : memref<1x4x8x8xf32, #tpu.memory_space<vmem>>, vector<1x4x8x8xf32>
    %1 = vector.shape_cast %0 : vector<1x4x8x8xf32> to vector<4x8x8xf32>
    %c0_3 = arith.constant 0 : index
    %c0_4 = arith.constant 0 : index
    %c0_5 = arith.constant 0 : index
    %2 = vector.load %arg4[%c0_3, %c0_4, %c0_5] : memref<4x1x1xf32, #tpu.memory_space<vmem>>, vector<4x1x1xf32>
    %3 = vector.broadcast %2 : vector<4x1x1xf32> to vector<4x8x8xf32>
    %4 = arith.mulf %1, %3 : vector<4x8x8xf32>
    %cst = arith.constant dense<0.000000e+00> : vector<8x8xf32>
    %5 = vector.multi_reduction <add>, %4, %cst [0] : vector<4x8x8xf32> to vector<8x8xf32>
    %c0_6 = arith.constant 0 : index
    %c0_7 = arith.constant 0 : index
    %6 = vector.load %arg2[%c0_6, %c0_7] : memref<16x8xf32, #tpu.memory_space<vmem>>, vector<16x8xf32>
    %cst_8 = arith.constant dense<0.000000e+00> : vector<16x8xf32>
    %7 = tpu.matmul %6, %5, %cst_8 {dimension_numbers = #tpu.dot_dimension_numbers<[1], [0], [0], [1], [0, 0, 1, 1], [], []>} : vector<16x8xf32>, vector<8x8xf32>, vector<16x8xf32> -> vector<16x8xf32>
    %c0_9 = arith.constant 0 : index
    %c0_10 = arith.constant 0 : index
    %8 = vector.load %arg3[%c0_9, %c0_10] : memref<16x8xf32, #tpu.memory_space<vmem>>, vector<16x8xf32>
    %cst_11 = arith.constant dense<0.000000e+00> : vector<16x16xf32>
    %9 = tpu.matmul %7, %8, %cst_11 {dimension_numbers = #tpu.dot_dimension_numbers<[1], [1], [0], [0], [0, 0, 1, 0], [], []>} : vector<16x8xf32>, vector<16x8xf32>, vector<16x16xf32> -> vector<16x16xf32>
    %c0_12 = arith.constant 0 : index
    %10 = memref.load %arg5[%c0_12] : memref<1xf32, #tpu.memory_space<smem>>
    %11 = vector.broadcast %10 : f32 to vector<16x16xf32>
    %12 = arith.addf %9, %11 : vector<16x16xf32>
    %cst_13 = arith.constant 0.000000e+00 : f32
    %13 = vector.broadcast %cst_13 : f32 to vector<16x16xf32>
    %14 = arith.subf %13, %12 : vector<16x16xf32>
    %15 = math.exp %14 : vector<16x16xf32>
    %cst_14 = arith.constant 1.000000e+00 : f32
    %16 = vector.broadcast %cst_14 : f32 to vector<16x16xf32>
    %17 = arith.addf %16, %15 : vector<16x16xf32>
    %cst_15 = arith.constant 1.000000e+00 : f32
    %18 = vector.broadcast %cst_15 : f32 to vector<16x16xf32>
    %19 = arith.divf %18, %17 : vector<16x16xf32>
    %c0_16 = arith.constant 0 : index
    %c0_17 = arith.constant 0 : index
    %c0_18 = arith.constant 0 : index
    %20 = vector.load %arg6[%c0_16, %c0_17, %c0_18] : memref<1x16x16xf32, #tpu.memory_space<vmem>>, vector<1x16x16xf32>
    %21 = vector.shape_cast %20 : vector<1x16x16xf32> to vector<16x16xf32>
    %22 = vector.shape_cast %19 : vector<16x16xf32> to vector<1x16x16xf32>
    tpu.vector_store %arg6[%c0_16, %c0_17, %c0_18], %22 {strides = array<i32>} : memref<1x16x16xf32, #tpu.memory_space<vmem>>, vector<1x16x16xf32>,
    return
  }
  func.func @transform_0(%arg0: i32) -> (i32, i32, i32, i32) {
    %c0_i32 = arith.constant 0 : i32
    %c0_i32_0 = arith.constant 0 : i32
    %c0_i32_1 = arith.constant 0 : i32
    %c0_i32_2 = arith.constant 0 : i32
    return %arg0, %c0_i32, %c0_i32_0, %c0_i32_1 : i32, i32, i32, i32
  }
  func.func @transform_1(%arg0: i32) -> (i32, i32) {
    %c0_i32 = arith.constant 0 : i32
    %c0_i32_0 = arith.constant 0 : i32
    %c0_i32_1 = arith.constant 0 : i32
    return %c0_i32, %c0_i32_0 : i32, i32
  }
  func.func @transform_2(%arg0: i32) -> (i32, i32) {
    %c0_i32 = arith.constant 0 : i32
    %c0_i32_0 = arith.constant 0 : i32
    %c0_i32_1 = arith.constant 0 : i32
    return %c0_i32, %c0_i32_0 : i32, i32
  }
  func.func @transform_3(%arg0: i32) -> (i32, i32, i32) {
    %c0_i32 = arith.constant 0 : i32
    %c0_i32_0 = arith.constant 0 : i32
    %c0_i32_1 = arith.constant 0 : i32
    %c0_i32_2 = arith.constant 0 : i32
    return %c0_i32, %c0_i32_0, %c0_i32_1 : i32, i32, i32
  }
  func.func @transform_4(%arg0: i32) -> i32 {
    %c0_i32 = arith.constant 0 : i32
    %c0_i32_0 = arith.constant 0 : i32
    return %c0_i32 : i32
  }
  func.func @transform_5(%arg0: i32) -> (i32, i32, i32) {
    %c0_i32 = arith.constant 0 : i32
    %c0_i32_0 = arith.constant 0 : i32
    %c0_i32_1 = arith.constant 0 : i32
    return %arg0, %c0_i32, %c0_i32_0 : i32, i32, i32
  }
}

</mosaic_0001>

<llo_original>
// kernel: tpu_custom_call.1
$region0: #{tpu_custom_call.1}
  #allocation0 [shape = 'u32[]', space=smem, size = 0x4, offset = 0x4, fixed_abs, tag = 'smem constant byte address 0x4 - core index']
  #allocation1 [shape = 'u32[144,128]{1,0:T(1,128)}', space=vmem, size = 0x12000, scoped, tag = 'internal scratch']
  #allocation2 [shape = 'f32[1]{0:T(128)S(6)}', space=smem, size = 0x200, scoped, tag = 'scoped memory for tpu_custom_call.1']
  %s0 = inlined_call_operand.hbm [shape: f32[2,4,8,8], index: 0, kind: input, shape index: {}]
  %s1 = inlined_call_operand.vmem [shape: f32[16,8], index: 1, kind: input, shape index: {}]
  %s2 = inlined_call_operand.vmem [shape: f32[16,8], index: 2, kind: input, shape index: {}]
  %s3 = inlined_call_operand.vmem [shape: f32[4,1,1], index: 3, kind: input, shape index: {}]
  %s4 = inlined_call_operand.<no memory space> [shape: f32[1], index: 4, kind: input, shape index: {}]
  %s5 = inlined_call_operand.hbm [shape: f32[2,16,16], index: 5, kind: output, shape index: {}]
  %s6 = sld [smem:[#allocation0]]
  $region57: #{tpu_custom_call.1} parent=0
    _
  %s8 = ssub.s32 1, %s6
  %s9 = scalar_select 0, %s8, %s6
  %10 = sst [smem:[#allocation2]] %s4
  $region1: #{tpu_custom_call.1} parent=0
    #allocation3 [shape = 'u8[32768]{0}', space=vmem, size = 0x8000, scoped, tag = 'input window, operand 0']
    #allocation4 [shape = 's32[2]{0}', space=sflag, size = 0x8, scoped, tag = 'scoped memory for tpu_custom_call.1']
    #allocation5 [shape = 's32[2]{0}', space=sflag, size = 0x8, scoped, tag = 'scoped memory for tpu_custom_call.1']
    #allocation6 [shape = 'u8[16384]{0}', space=vmem, size = 0x4000, scoped, tag = 'output window, operand 0']
    %11 = vsyncpa [#allocation4], 0
    %s12 = scalar_lea.sflag [#allocation4], 1
    %13 = vsyncpa %s12, 0
    %14 = vsyncpa [#allocation5], 0
    %s15 = scalar_lea.sflag [#allocation5], 1
    %16 = vsyncpa %s15, 0
    loop: start=0, step=1, limit=4
    $region2: #{tpu_custom_call.1} parent=1 // loop_pre_header
      _
    $region3: #{tpu_custom_call.1} parent=1 // loop_header
      %s18 = sphi 0, %s22
      %p19 = scmp.ge.s32.totalorder %s18, 4
      %s28 = sphi 0, %s30
      %s31 = sphi 0, %s28
      %s32 = sphi 0, %s31
      %s48 = sphi 0, %s32
      %s52 = sphi 0, %s52
      %s54 = sphi 0, %s52
      %s55 = sphi 0, %s54
      %s69 = sphi 0, %s55
      %s73 = sphi 0, %s73
      %s75 = sphi 0, %s73
      %s76 = sphi 0, %s75
      %s90 = sphi 0, %s76
      %s94 = sphi 0, %s94
      %s96 = sphi 0, %s94
      %s97 = sphi 0, %s96
      %s111 = sphi 0, %s97
      %s115 = sphi 0, %s115
      %s117 = sphi 0, %s115
      %s118 = sphi 0, %s117
      %s132 = sphi 0, %s118
      %s138 = sphi 0, %s140
      %s141 = sphi 0, %s138
      %s142 = sphi 0, %s141
      %s158 = sphi 0, %s142
    $region4: #{tpu_custom_call.1} parent=1 // loop_header_branch
      %21 = sbr.rel (%p19) target = $region8
    $region5: #{tpu_custom_call.1} parent=1 // loop_body
      %s23 = ssub.s32 %s18, 1
      %s24 = ssub.s32 %s18, 2
      %s25 = sadd.s32 %s18, 1
      %s26 = ssub.s32 %s18, %s25
      %p27 = scmp.eq.s32.totalorder %s26, 0
      %s29 = sadd.s32 %s28, 1
      %s30 = scalar_select %p27, %s28, %s29
      %p33 = pneg %p27
      %p34 = scmp.eq.s32.totalorder %s18, 1
      %p35 = por %p33, %p34
      %p36 = scmp.ne.s32.totalorder %s28, %s31
      %p37 = scmp.eq.s32.totalorder %s18, 0
      %p38 = por %p36, %p37
      %p39 = scmp.ne.s32.totalorder %s28, %s31
      %p40 = scmp.eq.s32.totalorder %s23, 1
      %p41 = por %p39, %p40
      %p42 = scmp.ne.s32.totalorder %s31, %s32
      %p43 = scmp.eq.s32.totalorder %s23, 0
      %p44 = por %p42, %p43
      %p45 = scmp.ne.s32.totalorder %s31, %s32
      %p46 = scmp.eq.s32.totalorder %s24, 1
      %p47 = por %p45, %p46
      %p49 = scmp.ne.s32.totalorder %s32, %s48
      %p50 = scmp.eq.s32.totalorder %s24, 0
      %p51 = por %p49, %p50
      %s53 = sadd.s32 %s52, 1
      %p56 = scmp.eq.s32.totalorder %s18, 1
      %p57 = scmp.ne.s32.totalorder %s52, %s54
      %p58 = scmp.eq.s32.totalorder %s18, 0
      %p59 = por %p57, %p58
      %p60 = scmp.ne.s32.totalorder %s52, %s54
      %p61 = scmp.eq.s32.totalorder %s23, 1
      %p62 = por %p60, %p61
      %p63 = scmp.ne.s32.totalorder %s54, %s55
      %p64 = scmp.eq.s32.totalorder %s23, 0
      %p65 = por %p63, %p64
      %p66 = scmp.ne.s32.totalorder %s54, %s55
      %p67 = scmp.eq.s32.totalorder %s24, 1
      %p68 = por %p66, %p67
      %p70 = scmp.ne.s32.totalorder %s55, %s69
      %p71 = scmp.eq.s32.totalorder %s24, 0
      %p72 = por %p70, %p71
      %s74 = sadd.s32 %s73, 1
      %p77 = scmp.eq.s32.totalorder %s18, 1
      %p78 = scmp.ne.s32.totalorder %s73, %s75
      %p79 = scmp.eq.s32.totalorder %s18, 0
      %p80 = por %p78, %p79
      %p81 = scmp.ne.s32.totalorder %s73, %s75
      %p82 = scmp.eq.s32.totalorder %s23, 1
      %p83 = por %p81, %p82
      %p84 = scmp.ne.s32.totalorder %s75, %s76
      %p85 = scmp.eq.s32.totalorder %s23, 0
      %p86 = por %p84, %p85
      %p87 = scmp.ne.s32.totalorder %s75, %s76
      %p88 = scmp.eq.s32.totalorder %s24, 1
      %p89 = por %p87, %p88
      %p91 = scmp.ne.s32.totalorder %s76, %s90
      %p92 = scmp.eq.s32.totalorder %s24, 0
      %p93 = por %p91, %p92
      %s95 = sadd.s32 %s94, 1
      %p98 = scmp.eq.s32.totalorder %s18, 1
      %p99 = scmp.ne.s32.totalorder %s94, %s96
      %p100 = scmp.eq.s32.totalorder %s18, 0
      %p101 = por %p99, %p100
      %p102 = scmp.ne.s32.totalorder %s94, %s96
      %p103 = scmp.eq.s32.totalorder %s23, 1
      %p104 = por %p102, %p103
      %p105 = scmp.ne.s32.totalorder %s96, %s97
      %p106 = scmp.eq.s32.totalorder %s23, 0
      %p107 = por %p105, %p106
      %p108 = scmp.ne.s32.totalorder %s96, %s97
      %p109 = scmp.eq.s32.totalorder %s24, 1
      %p110 = por %p108, %p109
      %p112 = scmp.ne.s32.totalorder %s97, %s111
      %p113 = scmp.eq.s32.totalorder %s24, 0
      %p114 = por %p112, %p113
      %s116 = sadd.s32 %s115, 1
      %p119 = scmp.eq.s32.totalorder %s18, 1
      %p120 = scmp.ne.s32.totalorder %s115, %s117
      %p121 = scmp.eq.s32.totalorder %s18, 0
      %p122 = por %p120, %p121
      %p123 = scmp.ne.s32.totalorder %s115, %s117
      %p124 = scmp.eq.s32.totalorder %s23, 1
      %p125 = por %p123, %p124
      %p126 = scmp.ne.s32.totalorder %s117, %s118
      %p127 = scmp.eq.s32.totalorder %s23, 0
      %p128 = por %p126, %p127
      %p129 = scmp.ne.s32.totalorder %s117, %s118
      %p130 = scmp.eq.s32.totalorder %s24, 1
      %p131 = por %p129, %p130
      %p133 = scmp.ne.s32.totalorder %s118, %s132
      %p134 = scmp.eq.s32.totalorder %s24, 0
      %p135 = por %p133, %p134
      %s136 = ssub.s32 %s18, %s25
      %p137 = scmp.eq.s32.totalorder %s136, 0
      %s139 = sadd.s32 %s138, 1
      %s140 = scalar_select %p137, %s138, %s139
      %p143 = pneg %p137
      %p144 = scmp.eq.s32.totalorder %s18, 1
      %p145 = por %p143, %p144
      %p146 = scmp.ne.s32.totalorder %s138, %s141
      %p147 = scmp.eq.s32.totalorder %s18, 0
      %p148 = por %p146, %p147
      %p149 = scmp.ne.s32.totalorder %s138, %s141
      %p150 = scmp.eq.s32.totalorder %s23, 1
      %p151 = por %p149, %p150
      %p152 = scmp.ne.s32.totalorder %s141, %s142
      %p153 = scmp.eq.s32.totalorder %s23, 0
      %p154 = por %p152, %p153
      %p155 = scmp.ne.s32.totalorder %s141, %s142
      %p156 = scmp.eq.s32.totalorder %s24, 1
      %p157 = por %p155, %p156
      %p159 = scmp.ne.s32.totalorder %s142, %s158
      %p160 = scmp.eq.s32.totalorder %s24, 0
      %p161 = por %p159, %p160
      %p162 = scmp.le.s32.totalorder 1, %s18
      %p163 = scmp.lt.s32.totalorder %s18, 3
      %p164 = pnand %p162, %p163
      %p165 = pneg %p164
      // Predicated region
      $region9: #{tpu_custom_call.1} parent=5 // pred_check
        _
      $region10: #{tpu_custom_call.1} parent=5 // pred_check_branch
        %167 = sbr.rel (%p164) target = $region12
      $region11: #{tpu_custom_call.1} parent=5 // pred_region
        %s168 = ssub.s32 %s18, 1
        // Predicated region
        $region13: #{tpu_custom_call.1} parent=11 // pred_check
          %p169 = pneg %p65
        $region14: #{tpu_custom_call.1} parent=11 // pred_check_branch
          %171 = sbr.rel (%p169) target = $region16
        $region15: #{tpu_custom_call.1} parent=11 // pred_region
          _
        $region16: #{tpu_custom_call.1} parent=11 // pred_fallthru
          _
        // Predicated region
        $region17: #{tpu_custom_call.1} parent=11 // pred_check
          %p172 = pneg %p86
        $region18: #{tpu_custom_call.1} parent=11 // pred_check_branch
          %174 = sbr.rel (%p172) target = $region20
        $region19: #{tpu_custom_call.1} parent=11 // pred_region
          _
        $region20: #{tpu_custom_call.1} parent=11 // pred_fallthru
          _
        // Predicated region
        $region21: #{tpu_custom_call.1} parent=11 // pred_check
          %p175 = pneg %p107
        $region22: #{tpu_custom_call.1} parent=11 // pred_check_branch
          %177 = sbr.rel (%p175) target = $region24
        $region23: #{tpu_custom_call.1} parent=11 // pred_region
          _
        $region24: #{tpu_custom_call.1} parent=11 // pred_fallthru
          _
        // Predicated region
        $region25: #{tpu_custom_call.1} parent=11 // pred_check
          %p178 = pneg %p128
        $region26: #{tpu_custom_call.1} parent=11 // pred_check_branch
          %180 = sbr.rel (%p178) target = $region28
        $region27: #{tpu_custom_call.1} parent=11 // pred_region
          _
        $region28: #{tpu_custom_call.1} parent=11 // pred_fallthru
          _
      $region12: #{tpu_custom_call.1} parent=5 // pred_fallthru
        _
      %p181 = scmp.lt.s32.totalorder %s18, 2
      // Predicated region
      $region29: #{tpu_custom_call.1} parent=5 // pred_check
        %p182 = pneg %p181
      $region30: #{tpu_custom_call.1} parent=5 // pred_check_branch
        %184 = sbr.rel (%p182) target = $region32
      $region31: #{tpu_custom_call.1} parent=5 // pred_region
        // Predicated region
        $region33: #{tpu_custom_call.1} parent=31 // pred_check
          %p185 = pneg %p38
        $region34: #{tpu_custom_call.1} parent=31 // pred_check_branch
          %187 = sbr.rel (%p185) target = $region36
        $region35: #{tpu_custom_call.1} parent=31 // pred_region
          %s188 = sand.u32 %s28, 1
          %s189 = scalar_lea.sflag [#allocation4], %s188
          %s190 = sand.u32 %s28, 1
          %s191 = smul.addr %s190, 32
          %s192 = scalar_lea.vmem [#allocation3], %s191
          %s194 = ssub.s32 512, 512
          %195 = vsyncadd %s189, %s194
          %s196 = smul.addr %s18, 4
          %s197 = smul.addr %s196, 128
          %s198 = scalar_lea.hbm %s0, %s197
          %s199 = sshll.u32 %s192, 4
          %s200 = int_to_ptr.vmem [resolvable:$true] %s199
          %205 = dma.hbm_to_vmem [thread:$0]  %s198, 512, %s200, %s189, 128, 128, 8
        $region36: #{tpu_custom_call.1} parent=31 // pred_fallthru
          _
      $region32: #{tpu_custom_call.1} parent=5 // pred_fallthru
        _
      %p206 = scmp.le.s32.totalorder 1, %s18
      %p207 = scmp.lt.s32.totalorder %s18, 3
      %p208 = pnand %p206, %p207
      %p209 = pneg %p208
      // Predicated region
      $region37: #{tpu_custom_call.1} parent=5 // pred_check
        _
      $region38: #{tpu_custom_call.1} parent=5 // pred_check_branch
        %211 = sbr.rel (%p208) target = $region40
      $region39: #{tpu_custom_call.1} parent=5 // pred_region
        %s212 = ssub.s32 %s18, 1
        %s213 = sand.u32 %s31, 1
        %s214 = scalar_lea.sflag [#allocation4], %s213
        %s215 = sand.u32 %s31, 1
        %s216 = smul.addr %s215, 32
        %s217 = scalar_lea.vmem [#allocation3], %s216
        // Predicated region
        $region41: #{tpu_custom_call.1} parent=39 // pred_check
          %p218 = pneg %p44
        $region42: #{tpu_custom_call.1} parent=39 // pred_check_branch
          %220 = sbr.rel (%p218) target = $region44
        $region43: #{tpu_custom_call.1} parent=39 // pred_region
          %221 = dma.done %s214, 512
        $region44: #{tpu_custom_call.1} parent=39 // pred_fallthru
          _
        %s222 = sand.u32 %s31, 1
        %s223 = scalar_lea.sflag [#allocation4], %s222
        %s224 = sand.u32 %s31, 1
        %s225 = smul.addr %s224, 32
        %s226 = scalar_lea.vmem [#allocation3], %s225
        %p227 = pneg %p44
        %p228 = pneg %p41
        %p229 = pneg %p65
        %p230 = pneg %p62
        %p231 = pneg %p86
        %p232 = pneg %p83
        %p233 = pneg %p107
        %p234 = pneg %p104
        %p235 = pneg %p128
        %p236 = pneg %p125
        %p237 = pneg %p154
        %p238 = pneg %p151
        %s239 = sand.u32 %s141, 1
        %s240 = scalar_lea.sflag [#allocation5], %s239
        %s241 = sand.u32 %s141, 1
        %s242 = smul.addr %s241, 16
        %s243 = scalar_lea.vmem [#allocation6], %s242
        %v244 = vld [vmem:[%s217] sm:$0xff]
        %v245 = vld [vmem:[%s217 + $0x8] sm:$0xff]
        %v246 = vld [vmem:[%s217 + $0x10] sm:$0xff]
        %v247 = vld [vmem:[%s217 + $0x18] sm:$0xff]
        %v248 = vld [vmem:[%s3] sm:$0x1]
        %v249 = vld [vmem:[%s3 + $0x1] sm:$0x1]
        %v250 = vld [vmem:[%s3 + $0x2] sm:$0x1]
        %v251 = vld [vmem:[%s3 + $0x3] sm:$0x1]
        %v256 = vlaneseq
        %v257 = vshrl.u32 %v256, 7
        %v258 = vsub.s32 0, %v257
        %v259 = vrot.slane %v248, %v258
        %v260 = vlaneseq
        %v261 = vshrl.u32 %v260, 7
        %v262 = vsub.s32 0, %v261
        %v263 = vrot.slane %v249, %v262
        %v264 = vlaneseq
        %v265 = vshrl.u32 %v264, 7
        %v266 = vsub.s32 0, %v265
        %v267 = vrot.slane %v250, %v266
        %v268 = vlaneseq
        %v269 = vshrl.u32 %v268, 7
        %v270 = vsub.s32 0, %v269
        %v271 = vrot.slane %v251, %v270
        %272 = vset.pattern.permute.xlu0 0
        %273 = vperm.xlu0 %272, %v259
        %v274 = vpop.permute.xlu0 %273
        %276 = vset.pattern.permute.xlu0 0
        %277 = vperm.xlu0 %276, %v263
        %v278 = vpop.permute.xlu0 %277
        %280 = vset.pattern.permute.xlu0 0
        %281 = vperm.xlu0 %280, %v267
        %v282 = vpop.permute.xlu0 %281
        %284 = vset.pattern.permute.xlu0 0
        %285 = vperm.xlu0 %284, %v271
        %v286 = vpop.permute.xlu0 %285
        %v288 = vmul.f32 %v244, %v274
        %v289 = vmul.f32 %v245, %v278
        %v290 = vmul.f32 %v246, %v282
        %v291 = vmul.f32 %v247, %v286
        %vm292 = vcmask 64512
        %v293 = vsel %vm292, %v288, 0.0
        %v294 = vsel %vm292, %v289, 0.0
        %v295 = vadd.f32 %v293, %v294
        %v296 = vsel %vm292, %v290, 0.0
        %v297 = vadd.f32 %v295, %v296
        %v298 = vsel %vm292, %v291, 0.0
        %v299 = vadd.f32 %v297, %v298
        %v300 = vld [vmem:[%s1] sm:$0xff]
        %v301 = vld [vmem:[%s1 + $0x8] sm:$0xff]
        %v303 = vsel %vm292, %v300, 0
        %v306 = vsel %vm292, %v301, 0
        %308 = vmatprep.subr.mxu0 0.0
        %309 = vmatpush1.msra.mxu0 %v299
        %310 = vmatprep.subr.mxu0 0.0
        %311 = vmatpush1.msra.mxu0 0.0
        %312 = vmatprep.subr.mxu0 0.0
        %313 = vmatpush1.msra.mxu0 0.0
        %314 = vmatprep.subr.mxu0 0.0
        %315 = vmatpush1.msra.mxu0 0.0
        %316 = vmatprep.subr.mxu0 0.0
        %317 = vmatpush1.msra.mxu0 0.0
        %318 = vmatprep.subr.mxu0 0.0
        %319 = vmatpush1.msra.mxu0 0.0
        %320 = vmatprep.subr.mxu0 0.0
        %321 = vmatpush1.msra.mxu0 0.0
        %322 = vmatprep.subr.mxu0 0.0
        %323 = vmatpush1.msra.mxu0 0.0
        %324 = vmatprep.subr.mxu0 0.0
        %325 = vmatpush1.msra.mxu0 0.0
        %326 = vmatprep.subr.mxu0 0.0
        %327 = vmatpush1.msra.mxu0 0.0
        %328 = vmatprep.subr.mxu0 0.0
        %329 = vmatpush1.msra.mxu0 0.0
        %330 = vmatprep.subr.mxu0 0.0
        %331 = vmatpush1.msra.mxu0 0.0
        %332 = vmatprep.subr.mxu0 0.0
        %333 = vmatpush1.msra.mxu0 0.0
        %334 = vmatprep.subr.mxu0 0.0
        %335 = vmatpush1.msra.mxu0 0.0
        %336 = vmatprep.subr.mxu0 0.0
        %337 = vmatpush1.msra.mxu0 0.0
        %338 = vmatprep.subr.mxu0 0.0
        %339 = vmatpush1.msra.mxu0 0.0
        %340 = vmatprep.subr.mxu0 0.0
        %341 = vmatpush1.msra.mxu0 0.0
        %342 = vmatprep.subr.mxu0 0.0
        %343 = vmatpush1.msra.mxu0 0.0
        %344 = vmatprep.subr.mxu0 0.0
        %345 = vmatpush1.msra.mxu0 0.0
        %346 = vmatprep.subr.mxu0 0.0
        %347 = vmatpush1.msra.mxu0 0.0
        %348 = vmatprep.subr.mxu0 0.0
        %349 = vmatpush1.msra.mxu0 0.0
        %350 = vmatprep.subr.mxu0 0.0
        %351 = vmatpush1.msra.mxu0 0.0
        %352 = vmatprep.subr.mxu0 0.0
        %353 = vmatpush1.msra.mxu0 0.0
        %354 = vmatprep.subr.mxu0 0.0
        %355 = vmatpush1.msra.mxu0 0.0
        %356 = vmatprep.subr.mxu0 0.0
        %357 = vmatpush1.msra.mxu0 0.0
        %358 = vmatprep.subr.mxu0 0.0
        %359 = vmatpush1.msra.mxu0 0.0
        %360 = vmatprep.subr.mxu0 0.0
        %361 = vmatpush1.msra.mxu0 0.0
        %362 = vmatprep.subr.mxu0 0.0
        %363 = vmatpush1.msra.mxu0 0.0
        %364 = vmatprep.subr.mxu0 0.0
        %365 = vmatpush1.msra.mxu0 0.0
        %366 = vmatprep.subr.mxu0 0.0
        %367 = vmatpush1.msra.mxu0 0.0
        %368 = vmatprep.subr.mxu0 0.0
        %369 = vmatpush1.msra.mxu0 0.0
        %370 = vmatprep.subr.mxu0 0.0
        %371 = vmatpush1.msra.mxu0 0.0
        %372 = vmatprep.mubr.f32.mxu0 0.0
        %373 = vmatmul.mubr.f32.gmra.mrb[0].mxu0 %v303
        %v374 = vpop.f32.mrb[0].mxu0
        %v375 = vadd.f32 0.0, %v374
        %v376 = vpop.f32.mrb[0].mxu0
        %377 = vmatprep.mubr.f32.mxu0 0.0
        %378 = vmatmul.mubr.f32.gmra.mrb[0].mxu0 %v306
        %v379 = vpop.f32.mrb[0].mxu0
        %v380 = vadd.f32 0.0, %v379
        %v381 = vpop.f32.mrb[0].mxu0
        %382 = vdwg.mxu0
        %v383 = vld [vmem:[%s2] sm:$0xff]
        %v384 = vld [vmem:[%s2 + $0x8] sm:$0xff]
        %s385 = sld [smem:[#allocation2]]
        %v386 = vstv %s385
        %v388 = vsel %vm292, %v375, 0
        %v391 = vsel %vm292, %v380, 0
        %v394 = vsel %vm292, %v383, 0
        %v397 = vsel %vm292, %v384, 0
        %399 = vmatprep.subr.mxu0 0.0
        %400 = vmatpush1.xpose.msra.mxu0 %v394
        %401 = vmatprep.subr.mxu0 0.0
        %402 = vmatpush1.xpose.msra.mxu0 %v397
        %403 = vmatprep.subr.mxu0 0.0
        %404 = vmatpush1.xpose.msra.mxu0 0.0
        %405 = vmatprep.subr.mxu0 0.0
        %406 = vmatpush1.xpose.msra.mxu0 0.0
        %407 = vmatprep.subr.mxu0 0.0
        %408 = vmatpush1.xpose.msra.mxu0 0.0
        %409 = vmatprep.subr.mxu0 0.0
        %410 = vmatpush1.xpose.msra.mxu0 0.0
        %411 = vmatprep.subr.mxu0 0.0
        %412 = vmatpush1.xpose.msra.mxu0 0.0
        %413 = vmatprep.subr.mxu0 0.0
        %414 = vmatpush1.xpose.msra.mxu0 0.0
        %415 = vmatprep.subr.mxu0 0.0
        %416 = vmatpush1.xpose.msra.mxu0 0.0
        %417 = vmatprep.subr.mxu0 0.0
        %418 = vmatpush1.xpose.msra.mxu0 0.0
        %419 = vmatprep.subr.mxu0 0.0
        %420 = vmatpush1.xpose.msra.mxu0 0.0
        %421 = vmatprep.subr.mxu0 0.0
        %422 = vmatpush1.xpose.msra.mxu0 0.0
        %423 = vmatprep.subr.mxu0 0.0
        %424 = vmatpush1.xpose.msra.mxu0 0.0
        %425 = vmatprep.subr.mxu0 0.0
        %426 = vmatpush1.xpose.msra.mxu0 0.0
        %427 = vmatprep.subr.mxu0 0.0
        %428 = vmatpush1.xpose.msra.mxu0 0.0
        %429 = vmatprep.subr.mxu0 0.0
        %430 = vmatpush1.xpose.msra.mxu0 0.0
        %431 = vmatprep.subr.mxu0 0.0
        %432 = vmatpush1.xpose.msra.mxu0 0.0
        %433 = vmatprep.subr.mxu0 0.0
        %434 = vmatpush1.xpose.msra.mxu0 0.0
        %435 = vmatprep.subr.mxu0 0.0
        %436 = vmatpush1.xpose.msra.mxu0 0.0
        %437 = vmatprep.subr.mxu0 0.0
        %438 = vmatpush1.xpose.msra.mxu0 0.0
        %439 = vmatprep.subr.mxu0 0.0
        %440 = vmatpush1.xpose.msra.mxu0 0.0
        %441 = vmatprep.subr.mxu0 0.0
        %442 = vmatpush1.xpose.msra.mxu0 0.0
        %443 = vmatprep.subr.mxu0 0.0
        %444 = vmatpush1.xpose.msra.mxu0 0.0
        %445 = vmatprep.subr.mxu0 0.0
        %446 = vmatpush1.xpose.msra.mxu0 0.0
        %447 = vmatprep.subr.mxu0 0.0
        %448 = vmatpush1.xpose.msra.mxu0 0.0
        %449 = vmatprep.subr.mxu0 0.0
        %450 = vmatpush1.xpose.msra.mxu0 0.0
        %451 = vmatprep.subr.mxu0 0.0
        %452 = vmatpush1.xpose.msra.mxu0 0.0
        %453 = vmatprep.subr.mxu0 0.0
        %454 = vmatpush1.xpose.msra.mxu0 0.0
        %455 = vmatprep.subr.mxu0 0.0
        %456 = vmatpush1.xpose.msra.mxu0 0.0
        %457 = vmatprep.subr.mxu0 0.0
        %458 = vmatpush1.xpose.msra.mxu0 0.0
        %459 = vmatprep.subr.mxu0 0.0
        %460 = vmatpush1.xpose.msra.mxu0 0.0
        %461 = vmatprep.subr.mxu0 0.0
        %462 = vmatpush1.xpose.msra.mxu0 0.0
        %463 = vmatprep.mubr.f32.mxu0 0.0
        %464 = vmatmul.mubr.f32.gmra.mrb[0].mxu0 %v388
        %v465 = vpop.f32.mrb[0].mxu0
        %v466 = vadd.f32 %v386, %v465
        %v467 = vpop.f32.mrb[0].mxu0
        %468 = vmatprep.mubr.f32.mxu0 0.0
        %469 = vmatmul.mubr.f32.gmra.mrb[0].mxu0 %v391
        %v470 = vpop.f32.mrb[0].mxu0
        %v471 = vadd.f32 %v386, %v470
        %v472 = vpop.f32.mrb[0].mxu0
        %473 = vdwg.mxu0
        %v474 = vsub.f32 0.0, %v466
        %v475 = vsub.f32 0.0, %v471
        %v476 = vmul.f32 %v474, 1.442695
        %v477 = vpow.pop %v476
        %v478 = vmul.f32 %v475, 1.442695
        %v479 = vpow.pop %v478
        %v480 = vadd.f32 %v477, 1.0
        %v481 = vadd.f32 %v479, 1.0
        %v482 = vrcp.pop %v480
        %v483 = vmul.f32 1.0, %v482
        %v484 = vrcp.pop %v481
        %v485 = vmul.f32 1.0, %v484
        %vm486 = vcmask 130048
        %487 = vst.msk [vmem:[%s243] sm:$0xff] %vm486, %v483
        %488 = vst.msk [vmem:[%s243 + $0x8] sm:$0xff] %vm486, %v485
        %s489 = sand.u32 %s141, 1
        %s490 = scalar_lea.sflag [#allocation5], %s489
        %s491 = sand.u32 %s141, 1
        %s492 = smul.addr %s491, 16
        %s493 = scalar_lea.vmem [#allocation6], %s492
        // Predicated region
        $region45: #{tpu_custom_call.1} parent=39 // pred_check
          %p494 = pneg %p151
        $region46: #{tpu_custom_call.1} parent=39 // pred_check_branch
          %496 = sbr.rel (%p494) target = $region48
        $region47: #{tpu_custom_call.1} parent=39 // pred_region
          %s498 = ssub.s32 256, 256
          %499 = vsyncadd %s490, %s498
          %s500 = smul.addr %s23, 2
          %s501 = smul.addr %s500, 128
          %s502 = scalar_lea.hbm %s5, %s501
          %s503 = sshll.u32 %s493, 4
          %s504 = int_to_ptr.vmem [resolvable:$true] %s503
          %509 = dma.vmem_to_hbm [thread:$0]  %s504, 256, %s502, %s490, 128, 128, 8
        $region48: #{tpu_custom_call.1} parent=39 // pred_fallthru
          _
      $region40: #{tpu_custom_call.1} parent=5 // pred_fallthru
        _
      %p510 = scmp.le.s32.totalorder 2, %s18
      // Predicated region
      $region49: #{tpu_custom_call.1} parent=5 // pred_check
        %p511 = pneg %p510
      $region50: #{tpu_custom_call.1} parent=5 // pred_check_branch
        %513 = sbr.rel (%p511) target = $region52
      $region51: #{tpu_custom_call.1} parent=5 // pred_region
        %s514 = ssub.s32 %s18, 2
        // Predicated region
        $region53: #{tpu_custom_call.1} parent=51 // pred_check
          %p515 = pneg %p157
        $region54: #{tpu_custom_call.1} parent=51 // pred_check_branch
          %517 = sbr.rel (%p515) target = $region56
        $region55: #{tpu_custom_call.1} parent=51 // pred_region
          %s518 = sand.u32 %s142, 1
          %s519 = scalar_lea.sflag [#allocation5], %s518
          %s520 = sand.u32 %s142, 1
          %s521 = smul.addr %s520, 16
          %s522 = scalar_lea.vmem [#allocation6], %s521
          %523 = dma.done %s519, 256
        $region56: #{tpu_custom_call.1} parent=51 // pred_fallthru
          _
      $region52: #{tpu_custom_call.1} parent=5 // pred_fallthru
        _
    $region6: #{tpu_custom_call.1} parent=1 // loop_footer
      %s22 = sadd.s32 1, %s18
    $region7: #{tpu_custom_call.1} parent=1 // loop_footer_branch
      %17 = sbr.rel target = $region3
    $region8: #{tpu_custom_call.1} parent=1 // loop_exit
      _
    %524 = vsyncpa [#allocation4], 1
    %s525 = scalar_lea.sflag [#allocation4], 1
    %526 = vsyncpa %s525, 1
    %527 = vsyncpa [#allocation5], 1
    %s528 = scalar_lea.sflag [#allocation5], 1
    %529 = vsyncpa %s528, 1

</llo_original>
